<compile_context>
chip_gen: v5e
topology: v5e:2x2
jax: 0.10.0
libtpu: 0.0.40
codegen_flags: <defaults>
</compile_context>

<pallas_src>
import functools

import jax
import jax.numpy as jnp
from jax.experimental import pallas as pl
from jax.experimental.pallas import tpu as pltpu


# Contract lhs dim 1 with rhs dim 1:  w [F_out, F_in]  x  x [B, F_in]  ->  [F_out, B].
# (Same transposed-RHS dimension numbers the official flash-attention TPU kernel uses.)
_TRANS_B_DIMS = (((1,), (1,)), ((), ()))


def dqn_kernel(x_ref, w1_ref, b1_ref, w2_ref, b2_ref, w3_ref, b3_ref, o_ref):
    # x_ref: [BM, 4]  (batch-major tile, batch on sublanes)
    # o_ref: [2, BM]  (feature-major, batch on the 128-lane axis -> lane-dense store)
    bm = x_ref.shape[0]
    # Chunk the compute so the [24, chunk] f32 intermediates stay in vregs while the
    # DMA block (BM) stays large.  bm is always a multiple of 128.
    if bm <= 512:
        chunk = bm
    else:
        chunk = next(c for c in (512, 384, 256, 128) if bm % c == 0)
    n_chunks = bm // chunk

    w1 = w1_ref[...]
    w2 = w2_ref[...]
    w3 = w3_ref[...]
    # Hoist the bias broadcasts out of the chunk loop.
    b1 = jnp.broadcast_to(b1_ref[...], (w1.shape[0], chunk))
    b2 = jnp.broadcast_to(b2_ref[...], (w2.shape[0], chunk))
    b3 = jnp.broadcast_to(b3_ref[...], (w3.shape[0], chunk))

    def body(c, carry):
        start = pl.multiple_of(c * chunk, 128)
        xc = x_ref[pl.ds(start, chunk), :]                          # [chunk, 4]
        # fc1 + ReLU -> [24, chunk] (feature-major; no explicit transpose needed)
        h1 = jax.lax.dot_general(w1, xc, _TRANS_B_DIMS,
                                 preferred_element_type=jnp.float32) + b1
        h1 = jnp.maximum(h1, 0.0)
        # fc2 + ReLU -> [24, chunk]
        h2 = jnp.dot(w2, h1, preferred_element_type=jnp.float32) + b2
        h2 = jnp.maximum(h2, 0.0)
        # fc3 -> [2, chunk], lane-dense store
        o_ref[:, pl.ds(start, chunk)] = (
            jnp.dot(w3, h2, preferred_element_type=jnp.float32) + b3)
        return carry

    jax.lax.fori_loop(0, n_chunks, body, 0, unroll=True)


def _round_up(x, m):
    return ((x + m - 1) // m) * m


@functools.partial(jax.jit, static_argnames=("block_b",))
def dqn_forward(x, params, block_b=4096):
    """x: [B, 4] float32.  params: w{1,2,3} as [F_out, F_in], b{1,2,3} as [F_out, 1].

    Returns [B, 2] float32 Q-values (matches the PyTorch forward).
    """
    assert block_b % 128 == 0, "batch block must be a multiple of the 128-lane width"
    w1, b1 = params["w1"], params["b1"]
    w2, b2 = params["w2"], params["b2"]
    w3, b3 = params["w3"], params["b3"]

    B = x.shape[0]
    b128 = _round_up(B, 128)
    bm = min(block_b, b128)
    # Keep >= 2 grid steps whenever there's enough work so the "parallel" batch axis
    # can shard across v7x's two TensorCores (one extra tiny step on v5e/v6e).
    if b128 >= 256 and b128 // bm < 2:
        bm = _round_up((b128 + 1) // 2, 128)
    bp = _round_up(B, bm)

    # Single fused pad of the batch dim; padded rows compute relu(bias) garbage that is
    # sliced off before returning.
    xp = jnp.pad(x, ((0, bp - B), (0, 0)))

    def const_spec(shape):
        # Tiny constant block, same index for every grid step -> VMEM-resident.
        # (pipeline_mode=pl.Buffered(1) would drop their pointless double buffer; the
        #  saving is a few tens of KB, so the default is kept for robustness.)
        return pl.BlockSpec(shape, lambda i: tuple(0 for _ in shape))

    out_t = pl.pallas_call(
        dqn_kernel,
        out_shape=jax.ShapeDtypeStruct((2, bp), jnp.float32),
        grid=(bp // bm,),
        in_specs=[
            pl.BlockSpec((bm, 4), lambda i: (i, 0)),   # activations blocked over batch
            const_spec(w1.shape), const_spec(b1.shape),
            const_spec(w2.shape), const_spec(b2.shape),
            const_spec(w3.shape), const_spec(b3.shape),
        ],
        out_specs=pl.BlockSpec((2, bm), lambda i: (0, i)),
        compiler_params=pltpu.CompilerParams(
            dimension_semantics=("parallel",),  # shard batch tiles across TCs (v7x)
        ),
    )(xp, w1, b1, w2, b2, w3, b3)

    # TODO(synk): callers that can consume feature-major Q-values should take
    # out_t[:, :B] directly; this transpose exists only to match the PyTorch [B, 2] API.
    return out_t[:, :B].T


def init_params(key):
    """PyTorch nn.Linear-style init (uniform +-1/sqrt(fan_in)).

    Weights kept in PyTorch's [fan_out, fan_in] layout (kernel computes W @ x^T);
    biases as [fan_out, 1] columns so they broadcast over the lane (batch) axis.
    """
    def linear(key, fan_in, fan_out):
        kw, kb = jax.random.split(key)
        bound = 1.0 / jnp.sqrt(jnp.float32(fan_in))
        w = jax.random.uniform(kw, (fan_out, fan_in), jnp.float32, -bound, bound)
        b = jax.random.uniform(kb, (fan_out, 1), jnp.float32, -bound, bound)
        return w, b

    k1, k2, k3 = jax.random.split(key, 3)
    w1, b1 = linear(k1, 4, 24)
    w2, b2 = linear(k2, 24, 24)
    w3, b3 = linear(k3, 24, 2)
    return {"w1": w1, "b1": b1, "w2": w2, "b2": b2, "w3": w3, "b3": b3}


def dqn_reference(x, params):
    h1 = jnp.maximum(x @ params["w1"].T + params["b1"].T, 0.0)
    h2 = jnp.maximum(h1 @ params["w2"].T + params["b2"].T, 0.0)
    return h2 @ params["w3"].T + params["b3"].T


if __name__ == "__main__":
    key = jax.random.PRNGKey(0)
    k_params, k_x1, k_x2 = jax.random.split(key, 3)
    params = init_params(k_params)

    # Small CartPole-style batch (8 states of dim 4): single grid step.
    x_small = jax.random.normal(k_x1, (8, 4), jnp.float32)
    out_small = jax.block_until_ready(dqn_forward(x_small, params))
    ref_small = dqn_reference(x_small, params)
    assert out_small.shape == (8, 2), out_small.shape
    assert jnp.allclose(out_small, ref_small, atol=1e-4, rtol=1e-4)

    # Replay-buffer-style batch (not a multiple of the block): exercises tail padding,
    # the 2-tile parallel grid, and the in-kernel chunk loop.
    x_big = jax.random.normal(k_x2, (1000, 4), jnp.float32)
    out_big = jax.block_until_ready(dqn_forward(x_big, params))
    ref_big = dqn_reference(x_big, params)
    assert out_big.shape == (1000, 2), out_big.shape
    assert jnp.allclose(out_big, ref_big, atol=1e-4, rtol=1e-4)

    print("KERNEL_OK")
</pallas_src>

<mosaic_0001>
module attributes {stable_mosaic.version = 11 : i64} {
  func.func @dqn_kernel(%arg0: i32, %arg1: memref<128x4xf32, #tpu.memory_space<vmem>>, %arg2: memref<24x4xf32, #tpu.memory_space<vmem>>, %arg3: memref<24x1xf32, #tpu.memory_space<vmem>>, %arg4: memref<24x24xf32, #tpu.memory_space<vmem>>, %arg5: memref<24x1xf32, #tpu.memory_space<vmem>>, %arg6: memref<2x24xf32, #tpu.memory_space<vmem>>, %arg7: memref<2x1xf32, #tpu.memory_space<vmem>>, %arg8: memref<2x128xf32, #tpu.memory_space<vmem>>) attributes {dimension_semantics = [#tpu.dimension_semantics<parallel>], iteration_bounds = array<i64: 1>, scalar_prefetch = 0 : i64, scratch_operands = 0 : i64, tpu.core_type = #tpu.core_type<tc>, window_params = [{transform_indices = @transform_0, window_bounds = array<i64: 128, 4>}, {pipeline_mode = #tpu.pipeline_mode<synchronous>, transform_indices = @transform_1, window_bounds = array<i64: 24, 4>}, {pipeline_mode = #tpu.pipeline_mode<synchronous>, transform_indices = @transform_2, window_bounds = array<i64: 24, 1>}, {pipeline_mode = #tpu.pipeline_mode<synchronous>, transform_indices = @transform_3, window_bounds = array<i64: 24, 24>}, {pipeline_mode = #tpu.pipeline_mode<synchronous>, transform_indices = @transform_4, window_bounds = array<i64: 24, 1>}, {pipeline_mode = #tpu.pipeline_mode<synchronous>, transform_indices = @transform_5, window_bounds = array<i64: 2, 24>}, {pipeline_mode = #tpu.pipeline_mode<synchronous>, transform_indices = @transform_6, window_bounds = array<i64: 2, 1>}, {transform_indices = @transform_7, window_bounds = array<i64: 2, 128>}]} {
    %c0 = arith.constant 0 : index
    %c0_0 = arith.constant 0 : index
    %0 = vector.load %arg2[%c0, %c0_0] : memref<24x4xf32, #tpu.memory_space<vmem>>, vector<24x4xf32>
    %c0_1 = arith.constant 0 : index
    %c0_2 = arith.constant 0 : index
    %1 = vector.load %arg4[%c0_1, %c0_2] : memref<24x24xf32, #tpu.memory_space<vmem>>, vector<24x24xf32>
    %c0_3 = arith.constant 0 : index
    %c0_4 = arith.constant 0 : index
    %2 = vector.load %arg6[%c0_3, %c0_4] : memref<2x24xf32, #tpu.memory_space<vmem>>, vector<2x24xf32>
    %c0_5 = arith.constant 0 : index
    %c0_6 = arith.constant 0 : index
    %3 = vector.load %arg3[%c0_5, %c0_6] : memref<24x1xf32, #tpu.memory_space<vmem>>, vector<24x1xf32>
    %4 = vector.shape_cast %3 : vector<24x1xf32> to vector<24x1xf32>
    %5 = vector.broadcast %4 : vector<24x1xf32> to vector<24x128xf32>
    %c0_7 = arith.constant 0 : index
    %c0_8 = arith.constant 0 : index
    %6 = vector.load %arg5[%c0_7, %c0_8] : memref<24x1xf32, #tpu.memory_space<vmem>>, vector<24x1xf32>
    %7 = vector.shape_cast %6 : vector<24x1xf32> to vector<24x1xf32>
    %8 = vector.broadcast %7 : vector<24x1xf32> to vector<24x128xf32>
    %c0_9 = arith.constant 0 : index
    %c0_10 = arith.constant 0 : index
    %9 = vector.load %arg7[%c0_9, %c0_10] : memref<2x1xf32, #tpu.memory_space<vmem>>, vector<2x1xf32>
    %10 = vector.shape_cast %9 : vector<2x1xf32> to vector<2x1xf32>
    %11 = vector.broadcast %10 : vector<2x1xf32> to vector<2x128xf32>
    %c0_i32 = arith.constant 0 : i32
    %c128_i32 = arith.constant 128 : i32
    %12 = arith.muli %c0_i32, %c128_i32 : i32
    %13 = tpu.assume_multiple %12, 128 : i32
    %14 = arith.index_cast %13 : i32 to index
    %c0_11 = arith.constant 0 : index
    %15 = vector.load %arg1[%14, %c0_11] : memref<128x4xf32, #tpu.memory_space<vmem>>, vector<128x4xf32>
    %cst = arith.constant dense<0.000000e+00> : vector<24x128xf32>
    %16 = tpu.matmul %0, %15, %cst {dimension_numbers = #tpu.dot_dimension_numbers<[1], [1], [0], [0], [0, 0, 1, 0], [], []>} : vector<24x4xf32>, vector<128x4xf32>, vector<24x128xf32> -> vector<24x128xf32>
    %17 = arith.addf %16, %5 : vector<24x128xf32>
    %cst_12 = arith.constant 0.000000e+00 : f32
    %18 = vector.broadcast %cst_12 : f32 to vector<24x128xf32>
    %19 = arith.maximumf %17, %18 : vector<24x128xf32>
    %cst_13 = arith.constant dense<0.000000e+00> : vector<24x128xf32>
    %20 = tpu.matmul %1, %19, %cst_13 {dimension_numbers = #tpu.dot_dimension_numbers<[1], [0], [0], [1], [0, 0, 1, 1], [], []>} : vector<24x24xf32>, vector<24x128xf32>, vector<24x128xf32> -> vector<24x128xf32>
    %21 = arith.addf %20, %8 : vector<24x128xf32>
    %cst_14 = arith.constant 0.000000e+00 : f32
    %22 = vector.broadcast %cst_14 : f32 to vector<24x128xf32>
    %23 = arith.maximumf %21, %22 : vector<24x128xf32>
    %cst_15 = arith.constant dense<0.000000e+00> : vector<2x128xf32>
    %24 = tpu.matmul %2, %23, %cst_15 {dimension_numbers = #tpu.dot_dimension_numbers<[1], [0], [0], [1], [0, 0, 1, 1], [], []>} : vector<2x24xf32>, vector<24x128xf32>, vector<2x128xf32> -> vector<2x128xf32>
    %25 = arith.addf %24, %11 : vector<2x128xf32>
    %c0_16 = arith.constant 0 : index
    %26 = arith.index_cast %13 : i32 to index
    %27 = vector.load %arg8[%c0_16, %26] : memref<2x128xf32, #tpu.memory_space<vmem>>, vector<2x128xf32>
    tpu.vector_store %arg8[%c0_16, %26], %25 {strides = array<i32>} : memref<2x128xf32, #tpu.memory_space<vmem>>, vector<2x128xf32>,
    %c1_i32 = arith.constant 1 : i32
    return
  }
  func.func @transform_0(%arg0: i32) -> (i32, i32) {
    %c0_i32 = arith.constant 0 : i32
    %c0_i32_0 = arith.constant 0 : i32
    return %arg0, %c0_i32 : i32, i32
  }
  func.func @transform_1(%arg0: i32) -> (i32, i32) {
    %c0_i32 = arith.constant 0 : i32
    %c0_i32_0 = arith.constant 0 : i32
    %c0_i32_1 = arith.constant 0 : i32
    return %c0_i32, %c0_i32_0 : i32, i32
  }
  func.func @transform_2(%arg0: i32) -> (i32, i32) {
    %c0_i32 = arith.constant 0 : i32
    %c0_i32_0 = arith.constant 0 : i32
    %c0_i32_1 = arith.constant 0 : i32
    return %c0_i32, %c0_i32_0 : i32, i32
  }
  func.func @transform_3(%arg0: i32) -> (i32, i32) {
    %c0_i32 = arith.constant 0 : i32
    %c0_i32_0 = arith.constant 0 : i32
    %c0_i32_1 = arith.constant 0 : i32
    return %c0_i32, %c0_i32_0 : i32, i32
  }
  func.func @transform_4(%arg0: i32) -> (i32, i32) {
    %c0_i32 = arith.constant 0 : i32
    %c0_i32_0 = arith.constant 0 : i32
    %c0_i32_1 = arith.constant 0 : i32
    return %c0_i32, %c0_i32_0 : i32, i32
  }
  func.func @transform_5(%arg0: i32) -> (i32, i32) {
    %c0_i32 = arith.constant 0 : i32
    %c0_i32_0 = arith.constant 0 : i32
    %c0_i32_1 = arith.constant 0 : i32
    return %c0_i32, %c0_i32_0 : i32, i32
  }
  func.func @transform_6(%arg0: i32) -> (i32, i32) {
    %c0_i32 = arith.constant 0 : i32
    %c0_i32_0 = arith.constant 0 : i32
    %c0_i32_1 = arith.constant 0 : i32
    return %c0_i32, %c0_i32_0 : i32, i32
  }
  func.func @transform_7(%arg0: i32) -> (i32, i32) {
    %c0_i32 = arith.constant 0 : i32
    %c0_i32_0 = arith.constant 0 : i32
    return %c0_i32, %arg0 : i32, i32
  }
}

</mosaic_0001>

<llo_original>
// kernel: dqn_forward.1
$region0: #{dqn_forward.1}
  #allocation0 [shape = 'u32[]', space=smem, size = 0x4, offset = 0x4, fixed_abs, tag = 'smem constant byte address 0x4 - core index']
  #allocation1 [shape = 'u32[72,128]{1,0:T(1,128)}', space=vmem, size = 0x9000, scoped, tag = 'internal scratch']
  %s0 = inlined_call_operand.vmem [shape: f32[128,4], index: 0, kind: input, shape index: {}]
  %s1 = inlined_call_operand.vmem [shape: f32[24,4], index: 1, kind: input, shape index: {}]
  %s2 = inlined_call_operand.vmem [shape: f32[24,1], index: 2, kind: input, shape index: {}]
  %s3 = inlined_call_operand.vmem [shape: f32[24,24], index: 3, kind: input, shape index: {}]
  %s4 = inlined_call_operand.vmem [shape: f32[24,1], index: 4, kind: input, shape index: {}]
  %s5 = inlined_call_operand.vmem [shape: f32[2,24], index: 5, kind: input, shape index: {}]
  %s6 = inlined_call_operand.vmem [shape: f32[2,1], index: 6, kind: input, shape index: {}]
  %s7 = inlined_call_operand.vmem [shape: f32[2,128], index: 7, kind: output, shape index: {}]
  %s8 = sld [smem:[#allocation0]]
  $region38: #{dqn_forward.1} parent=0
    _
  %s10 = ssub.s32 1, %s8
  %s11 = scalar_select 0, %s10, %s8
  // Predicated region
  $region2: #{dqn_forward.1} parent=0 // pred_check
    _
  $region3: #{dqn_forward.1} parent=0 // pred_check_branch
    %13 = sbr.rel (0) target = $region5
  $region4: #{dqn_forward.1} parent=0 // pred_region
    _
  $region5: #{dqn_forward.1} parent=0 // pred_fallthru
    _
  // Predicated region
  $region6: #{dqn_forward.1} parent=0 // pred_check
    _
  $region7: #{dqn_forward.1} parent=0 // pred_check_branch
    %15 = sbr.rel (0) target = $region9
  $region8: #{dqn_forward.1} parent=0 // pred_region
    _
  $region9: #{dqn_forward.1} parent=0 // pred_fallthru
    _
  // Predicated region
  $region10: #{dqn_forward.1} parent=0 // pred_check
    _
  $region11: #{dqn_forward.1} parent=0 // pred_check_branch
    %17 = sbr.rel (0) target = $region13
  $region12: #{dqn_forward.1} parent=0 // pred_region
    _
  $region13: #{dqn_forward.1} parent=0 // pred_fallthru
    _
  // Predicated region
  $region14: #{dqn_forward.1} parent=0 // pred_check
    _
  $region15: #{dqn_forward.1} parent=0 // pred_check_branch
    %19 = sbr.rel (0) target = $region17
  $region16: #{dqn_forward.1} parent=0 // pred_region
    _
  $region17: #{dqn_forward.1} parent=0 // pred_fallthru
    _
  // Predicated region
  $region18: #{dqn_forward.1} parent=0 // pred_check
    _
  $region19: #{dqn_forward.1} parent=0 // pred_check_branch
    %21 = sbr.rel (0) target = $region21
  $region20: #{dqn_forward.1} parent=0 // pred_region
    _
  $region21: #{dqn_forward.1} parent=0 // pred_fallthru
    _
  // Predicated region
  $region22: #{dqn_forward.1} parent=0 // pred_check
    _
  $region23: #{dqn_forward.1} parent=0 // pred_check_branch
    %23 = sbr.rel (0) target = $region25
  $region24: #{dqn_forward.1} parent=0 // pred_region
    _
  $region25: #{dqn_forward.1} parent=0 // pred_fallthru
    _
  // Predicated region
  $region26: #{dqn_forward.1} parent=0 // pred_check
    _
  $region27: #{dqn_forward.1} parent=0 // pred_check_branch
    %25 = sbr.rel (0) target = $region29
  $region28: #{dqn_forward.1} parent=0 // pred_region
    _
  $region29: #{dqn_forward.1} parent=0 // pred_fallthru
    _
  %v26 = vld [vmem:[%s1] sm:$0xff]
  %v27 = vld [vmem:[%s1 + $0x8] sm:$0xff]
  %v28 = vld [vmem:[%s1 + $0x10] sm:$0xff]
  %v29 = vld [vmem:[%s3] sm:$0xff]
  %v30 = vld [vmem:[%s3 + $0x8] sm:$0xff]
  %v31 = vld [vmem:[%s3 + $0x10] sm:$0xff]
  %v32 = vld [vmem:[%s5] sm:$0x3]
  %v33 = vld [vmem:[%s2] sm:$0xff]
  %v34 = vld [vmem:[%s2 + $0x8] sm:$0xff]
  %v35 = vld [vmem:[%s2 + $0x10] sm:$0xff]
  %37 = vset.pattern.permute.xlu0 0
  %38 = vperm.xlu0 %37, %v33
  %v39 = vpop.permute.xlu0 %38
  %42 = vset.pattern.permute.xlu0 0
  %43 = vperm.xlu0 %42, %v34
  %v44 = vpop.permute.xlu0 %43
  %47 = vset.pattern.permute.xlu0 0
  %48 = vperm.xlu0 %47, %v35
  %v49 = vpop.permute.xlu0 %48
  %v51 = vld [vmem:[%s4] sm:$0xff]
  %v52 = vld [vmem:[%s4 + $0x8] sm:$0xff]
  %v53 = vld [vmem:[%s4 + $0x10] sm:$0xff]
  %55 = vset.pattern.permute.xlu0 0
  %56 = vperm.xlu0 %55, %v51
  %v57 = vpop.permute.xlu0 %56
  %60 = vset.pattern.permute.xlu0 0
  %61 = vperm.xlu0 %60, %v52
  %v62 = vpop.permute.xlu0 %61
  %65 = vset.pattern.permute.xlu0 0
  %66 = vperm.xlu0 %65, %v53
  %v67 = vpop.permute.xlu0 %66
  %v69 = vld [vmem:[%s6] sm:$0x3]
  %71 = vset.pattern.permute.xlu0 0
  %72 = vperm.xlu0 %71, %v69
  %v73 = vpop.permute.xlu0 %72
  %v75 = vld [vmem:[%s0] sm:$0xff]
  %v76 = vld [vmem:[%s0 + $0x8] sm:$0xff]
  %v77 = vld [vmem:[%s0 + $0x10] sm:$0xff]
  %v78 = vld [vmem:[%s0 + $0x18] sm:$0xff]
  %v79 = vld [vmem:[%s0 + $0x20] sm:$0xff]
  %v80 = vld [vmem:[%s0 + $0x28] sm:$0xff]
  %v81 = vld [vmem:[%s0 + $0x30] sm:$0xff]
  %v82 = vld [vmem:[%s0 + $0x38] sm:$0xff]
  %v83 = vld [vmem:[%s0 + $0x40] sm:$0xff]
  %v84 = vld [vmem:[%s0 + $0x48] sm:$0xff]
  %v85 = vld [vmem:[%s0 + $0x50] sm:$0xff]
  %v86 = vld [vmem:[%s0 + $0x58] sm:$0xff]
  %v87 = vld [vmem:[%s0 + $0x60] sm:$0xff]
  %v88 = vld [vmem:[%s0 + $0x68] sm:$0xff]
  %v89 = vld [vmem:[%s0 + $0x70] sm:$0xff]
  %v90 = vld [vmem:[%s0 + $0x78] sm:$0xff]
  %vm91 = vcmask 31744
  %v93 = vsel %vm91, %v26, 0
  %v96 = vsel %vm91, %v27, 0
  %v99 = vsel %vm91, %v28, 0
  %v102 = vsel %vm91, %v75, 0
  %v105 = vsel %vm91, %v76, 0
  %v108 = vsel %vm91, %v77, 0
  %v111 = vsel %vm91, %v78, 0
  %v114 = vsel %vm91, %v79, 0
  %v117 = vsel %vm91, %v80, 0
  %v120 = vsel %vm91, %v81, 0
  %v123 = vsel %vm91, %v82, 0
  %v126 = vsel %vm91, %v83, 0
  %v129 = vsel %vm91, %v84, 0
  %v132 = vsel %vm91, %v85, 0
  %v135 = vsel %vm91, %v86, 0
  %v138 = vsel %vm91, %v87, 0
  %v141 = vsel %vm91, %v88, 0
  %v144 = vsel %vm91, %v89, 0
  %v147 = vsel %vm91, %v90, 0
  %149 = vmatpush.xpose.msra.mxu0 %v147
  %150 = vmatpush.xpose.msra.mxu0 %v144
  %151 = vmatpush.xpose.msra.mxu0 %v141
  %152 = vmatpush.xpose.msra.mxu0 %v138
  %153 = vmatpush.xpose.msra.mxu0 %v135
  %154 = vmatpush.xpose.msra.mxu0 %v132
  %155 = vmatpush.xpose.msra.mxu0 %v129
  %156 = vmatpush.xpose.msra.mxu0 %v126
  %157 = vmatpush.xpose.msra.mxu0 %v123
  %158 = vmatpush.xpose.msra.mxu0 %v120
  %159 = vmatpush.xpose.msra.mxu0 %v117
  %160 = vmatpush.xpose.msra.mxu0 %v114
  %161 = vmatpush.xpose.msra.mxu0 %v111
  %162 = vmatpush.xpose.msra.mxu0 %v108
  %163 = vmatpush.xpose.msra.mxu0 %v105
  %164 = vmatpush.xpose.msra.mxu0 %v102
  %165 = vmatmul.f32.gmra.mxu0 %v93
  %v166 = vpop.f32.mrf.mxu0
  %v167 = vadd.f32 %v39, %v166
  %168 = vmatmul.f32.gmra.mxu0 %v96
  %v169 = vpop.f32.mrf.mxu0
  %v170 = vadd.f32 %v44, %v169
  %171 = vmatmul.f32.gmra.mxu0 %v99
  %v172 = vpop.f32.mrf.mxu0
  %v173 = vadd.f32 %v49, %v172
  %174 = vdwg.mxu0
  %v175 = vmax.f32 %v167, 0.0
  %v176 = vmax.f32 %v170, 0.0
  %v177 = vmax.f32 %v173, 0.0
  %vm178 = vcmask 195584
  %v180 = vsel %vm178, %v29, 0
  %v183 = vsel %vm178, %v30, 0
  %v186 = vsel %vm178, %v31, 0
  %188 = vmatpush.msra.mxu0 0.0
  %189 = vmatpush.msra.mxu0 0.0
  %190 = vmatpush.msra.mxu0 0.0
  %191 = vmatpush.msra.mxu0 0.0
  %192 = vmatpush.msra.mxu0 0.0
  %193 = vmatpush.msra.mxu0 0.0
  %194 = vmatpush.msra.mxu0 0.0
  %195 = vmatpush.msra.mxu0 0.0
  %196 = vmatpush.msra.mxu0 0.0
  %197 = vmatpush.msra.mxu0 0.0
  %198 = vmatpush.msra.mxu0 0.0
  %199 = vmatpush.msra.mxu0 0.0
  %200 = vmatpush.msra.mxu0 0.0
  %201 = vmatpush.msra.mxu0 %v177
  %202 = vmatpush.msra.mxu0 %v176
  %203 = vmatpush.msra.mxu0 %v175
  %204 = vmatmul.f32.gmra.mxu0 %v180
  %v205 = vpop.f32.mrf.mxu0
  %v206 = vadd.f32 %v57, %v205
  %207 = vmatmul.f32.gmra.mxu0 %v183
  %v208 = vpop.f32.mrf.mxu0
  %v209 = vadd.f32 %v62, %v208
  %210 = vmatmul.f32.gmra.mxu0 %v186
  %v211 = vpop.f32.mrf.mxu0
  %v212 = vadd.f32 %v67, %v211
  %213 = vdwg.mxu0
  %v214 = vmax.f32 %v206, 0.0
  %v215 = vmax.f32 %v209, 0.0
  %v216 = vmax.f32 %v212, 0.0
  %v218 = vsel %vm178, %v32, 0
  %220 = vmatpush.msra.mxu0 0.0
  %221 = vmatpush.msra.mxu0 0.0
  %222 = vmatpush.msra.mxu0 0.0
  %223 = vmatpush.msra.mxu0 0.0
  %224 = vmatpush.msra.mxu0 0.0
  %225 = vmatpush.msra.mxu0 0.0
  %226 = vmatpush.msra.mxu0 0.0
  %227 = vmatpush.msra.mxu0 0.0
  %228 = vmatpush.msra.mxu0 0.0
  %229 = vmatpush.msra.mxu0 0.0
  %230 = vmatpush.msra.mxu0 0.0
  %231 = vmatpush.msra.mxu0 0.0
  %232 = vmatpush.msra.mxu0 0.0
  %233 = vmatpush.msra.mxu0 %v216
  %234 = vmatpush.msra.mxu0 %v215
  %235 = vmatpush.msra.mxu0 %v214
  %236 = vmatmul.f32.gmra.mxu0 %v218
  %v237 = vpop.f32.mrf.mxu0
  %v238 = vadd.f32 %v73, %v237
  %239 = vdwg.mxu0
  %240 = vst [vmem:[%s7] sm:$0x3] %v238
  // Predicated region
  $region30: #{dqn_forward.1} parent=0 // pred_check
    _
  $region31: #{dqn_forward.1} parent=0 // pred_check_branch
    %242 = sbr.rel (0) target = $region33
  $region32: #{dqn_forward.1} parent=0 // pred_region
    _
  $region33: #{dqn_forward.1} parent=0 // pred_fallthru
    _
  // Predicated region
  $region34: #{dqn_forward.1} parent=0 // pred_check
    _
  $region35: #{dqn_forward.1} parent=0 // pred_check_branch
    %244 = sbr.rel (0) target = $region37
  $region36: #{dqn_forward.1} parent=0 // pred_region
    _
  $region37: #{dqn_forward.1} parent=0 // pred_fallthru
    _

</llo_original>
